<compile_context>
chip_gen: v7x
topology: tpu7x:2x2x1
jax: 0.10.0
libtpu: 0.0.40
codegen_flags: <defaults>
</compile_context>

<pallas_src>
import jax
import jax.numpy as jnp
import numpy as np
from jax.experimental import pallas as pl
from jax.experimental.pallas import tpu as pltpu

BOARD = 9
S = BOARD * BOARD          # 81 spatial positions
C1 = 2                     # conv1 output channels
N_OUT = 81                 # policy logits
LANE = 128                 # lane-padded spatial / output width
N_PAD = 128


def _round_up(v, m):
    return ((v + m - 1) // m) * m


def policy_head_kernel(w1_sm, b1_sm, x_ref, v_ref, b2_ref, out_ref):
    # w1_sm:  (C1, C_in)        SMEM f32   1x1-conv weight (scalars)
    # b1_sm:  (C1,)             SMEM f32   1x1-conv bias
    # x_ref:  (C_in, TB, LANE)  VMEM       channel-major batch tile, lanes 81..127 = 0
    # v_ref:  (C1*LANE, N_PAD)  VMEM       fc weight, V[c*LANE + s, o] = W2[o, c, s]
    # b2_ref: (1, N_PAD)        VMEM f32   fc bias (zero-padded past 81)
    # out_ref:(TB, N_PAD)       VMEM f32
    c_in, tb, lane = x_ref.shape

    # conv1 (1x1) on the VPU: h_c = relu(sum_f w1[c,f] * x[f] + b1[c]), per (TB, LANE) plane.
    acc0 = jnp.full((tb, lane), b1_sm[0], dtype=jnp.float32)
    acc1 = jnp.full((tb, lane), b1_sm[1], dtype=jnp.float32)
    for f in range(c_in):
        xf = x_ref[f].astype(jnp.float32)          # upcast is a no-op for f32 inputs
        acc0 = acc0 + w1_sm[0, f] * xf
        acc1 = acc1 + w1_sm[1, f] * xf
    h0 = jnp.maximum(acc0, 0.0)
    h1 = jnp.maximum(acc1, 0.0)
    # Padded lanes (s >= 81) hold relu(b1[c]); harmless because V is zero there.

    # fc (9x9 valid conv over the full board) == one dense (TB, 2*LANE) x (2*LANE, N_PAD) matmul.
    h = jnp.concatenate([h0, h1], axis=1).astype(v_ref.dtype)      # (TB, 2*LANE)
    out = jnp.dot(h, v_ref[...], preferred_element_type=jnp.float32) + b2_ref[...]
    out_ref[...] = out.astype(out_ref.dtype)


def policy_head_forward(x, w1, b1, w2, b2, *, use_bf16=False, block_b=512):
    """x: (B, C_in, 9, 9) NCHW. Returns (B, 81) float32 logits."""
    B, C_in, H, W = x.shape
    assert (H, W) == (BOARD, BOARD), "fc is a 9x9 valid conv -> input must be 9x9"

    # Batch tiling: big blocks (MXU M dim), >=2 grid steps when possible so
    # v7x's second TensorCore gets work (dimension_semantics=('parallel',)).
    n_blocks = max(1, -(-B // block_b))
    if B > 8 and n_blocks == 1:
        n_blocks = 2
    TB = _round_up(-(-B // n_blocks), 8)
    B_pad = n_blocks * TB

    io_dtype = jnp.bfloat16 if use_bf16 else jnp.float32

    # x: NCHW -> channel-major, lane-padded (C_in, B_pad, LANE).
    x_cm = jnp.transpose(x.reshape(B, C_in, S), (1, 0, 2))
    x_cm = jnp.pad(x_cm, ((0, 0), (0, B_pad - B), (0, LANE - S))).astype(io_dtype)

    # conv1 params stay f32 scalars in SMEM (v5e has no bf16 VPU path).
    w1_2d = w1.reshape(C1, C_in).astype(jnp.float32)
    b1_1d = b1.reshape(C1).astype(jnp.float32)

    # w2: (81, 2, 9, 9) -> V[c, s, o] = w2[o, c, s], lane-padded on s and o, flattened over (c, s).
    v = jnp.transpose(w2.reshape(N_OUT, C1, S), (1, 2, 0))              # (2, 81, 81)
    v = jnp.pad(v, ((0, 0), (0, LANE - S), (0, N_PAD - N_OUT)))         # (2, 128, 128)
    v = v.reshape(C1 * LANE, N_PAD).astype(io_dtype)

    b2_r = jnp.pad(b2.reshape(1, N_OUT), ((0, 0), (0, N_PAD - N_OUT))).astype(jnp.float32)

    grid_spec = pltpu.PrefetchScalarGridSpec(
        num_scalar_prefetch=0,
        grid=(n_blocks,),
        in_specs=[
            pl.BlockSpec(memory_space=pltpu.MemorySpace.SMEM),          # w1 scalars
            pl.BlockSpec(memory_space=pltpu.MemorySpace.SMEM),          # b1 scalars
            pl.BlockSpec((C_in, TB, LANE), lambda i: (0, i, 0)),        # x batch tile
            pl.BlockSpec((C1 * LANE, N_PAD), lambda i: (0, 0)),         # V (resident)
            pl.BlockSpec((1, N_PAD), lambda i: (0, 0)),                 # b2 (resident)
        ],
        out_specs=pl.BlockSpec((TB, N_PAD), lambda i: (i, 0)),
    )
    out_pad = pl.pallas_call(
        policy_head_kernel,
        out_shape=jax.ShapeDtypeStruct((B_pad, N_PAD), jnp.float32),
        grid_spec=grid_spec,
        compiler_params=pltpu.CompilerParams(dimension_semantics=("parallel",)),
    )(w1_2d, b1_1d, x_cm, v, b2_r)
    return out_pad[:B, :N_OUT]


def reference_forward(x, w1, b1, w2, b2):
    """Pure-JAX reference mirroring the PyTorch module."""
    C_in = x.shape[1]
    h = jnp.einsum('bfhw,cf->bchw', x, w1.reshape(C1, C_in)) + b1[None, :, None, None]
    h = jnp.maximum(h, 0.0)
    out = jnp.einsum('bchw,ochw->bo', h, w2) + b2[None, :]
    return out


if __name__ == "__main__":
    B, C_in = 2, 4                       # feature_map_dim = 4
    key = jax.random.PRNGKey(0)
    kx, kw1, kb1, kw2, kb2 = jax.random.split(key, 5)

    x = jax.random.normal(kx, (B, C_in, BOARD, BOARD), dtype=jnp.float32)
    # Deterministic synthetic parameters (same shapes as the PyTorch module).
    w1 = jax.random.normal(kw1, (C1, C_in, 1, 1), dtype=jnp.float32) * 0.1
    b1 = jax.random.normal(kb1, (C1,), dtype=jnp.float32) * 0.1
    w2 = jax.random.normal(kw2, (N_OUT, C1, BOARD, BOARD), dtype=jnp.float32) * 0.1
    b2 = jax.random.normal(kb2, (N_OUT,), dtype=jnp.float32) * 0.1

    ref = reference_forward(x, w1, b1, w2, b2)

    # f32 path (default): bit-accurate vs. the reference.
    out = jax.block_until_ready(policy_head_forward(x, w1, b1, w2, b2))
    assert out.shape == (B, N_OUT)
    np.testing.assert_allclose(np.asarray(out), np.asarray(ref), rtol=1e-4, atol=1e-4)

    # bf16 storage path (recommended on v6e/v7x: halves HBM traffic; f32 accumulate).
    out_bf16 = jax.block_until_ready(policy_head_forward(x, w1, b1, w2, b2, use_bf16=True))
    np.testing.assert_allclose(np.asarray(out_bf16), np.asarray(ref), rtol=3e-2, atol=3e-2)

    print("KERNEL_OK")
</pallas_src>

<mosaic_0001>
module attributes {stable_mosaic.version = 11 : i64} {
  func.func @policy_head_kernel(%arg0: i32, %arg1: memref<2x4xf32, #tpu.memory_space<smem>>, %arg2: memref<2xf32, #tpu.memory_space<smem>>, %arg3: memref<4x8x128xf32, #tpu.memory_space<vmem>>, %arg4: memref<256x128xf32, #tpu.memory_space<vmem>>, %arg5: memref<1x128xf32, #tpu.memory_space<vmem>>, %arg6: memref<8x128xf32, #tpu.memory_space<vmem>>) attributes {dimension_semantics = [#tpu.dimension_semantics<parallel>], iteration_bounds = array<i64: 1>, scalar_prefetch = 0 : i64, scratch_operands = 0 : i64, tpu.core_type = #tpu.core_type<tc>, window_params = [{transform_indices = @transform_0, window_bounds = array<i64: 2, 4>}, {transform_indices = @transform_1, window_bounds = array<i64: 2>}, {transform_indices = @transform_2, window_bounds = array<i64: 4, 8, 128>}, {pipeline_mode = #tpu.pipeline_mode<synchronous>, transform_indices = @transform_3, window_bounds = array<i64: 256, 128>}, {pipeline_mode = #tpu.pipeline_mode<synchronous>, transform_indices = @transform_4, window_bounds = array<i64: 1, 128>}, {transform_indices = @transform_5, window_bounds = array<i64: 8, 128>}]} {
    %c0 = arith.constant 0 : index
    %0 = memref.load %arg2[%c0] : memref<2xf32, #tpu.memory_space<smem>>
    %1 = vector.broadcast %0 : f32 to vector<8x128xf32>
    %c1 = arith.constant 1 : index
    %2 = memref.load %arg2[%c1] : memref<2xf32, #tpu.memory_space<smem>>
    %3 = vector.broadcast %2 : f32 to vector<8x128xf32>
    %c0_0 = arith.constant 0 : index
    %c0_1 = arith.constant 0 : index
    %c0_2 = arith.constant 0 : index
    %4 = vector.load %arg3[%c0_0, %c0_1, %c0_2] : memref<4x8x128xf32, #tpu.memory_space<vmem>>, vector<1x8x128xf32>
    %5 = vector.shape_cast %4 : vector<1x8x128xf32> to vector<8x128xf32>
    %c0_3 = arith.constant 0 : index
    %c0_4 = arith.constant 0 : index
    %6 = memref.load %arg1[%c0_3, %c0_4] : memref<2x4xf32, #tpu.memory_space<smem>>
    %7 = vector.broadcast %6 : f32 to vector<8x128xf32>
    %8 = arith.mulf %7, %5 : vector<8x128xf32>
    %9 = arith.addf %1, %8 : vector<8x128xf32>
    %c1_5 = arith.constant 1 : index
    %c0_6 = arith.constant 0 : index
    %10 = memref.load %arg1[%c1_5, %c0_6] : memref<2x4xf32, #tpu.memory_space<smem>>
    %11 = vector.broadcast %10 : f32 to vector<8x128xf32>
    %12 = arith.mulf %11, %5 : vector<8x128xf32>
    %13 = arith.addf %3, %12 : vector<8x128xf32>
    %c1_7 = arith.constant 1 : index
    %c0_8 = arith.constant 0 : index
    %c0_9 = arith.constant 0 : index
    %14 = vector.load %arg3[%c1_7, %c0_8, %c0_9] : memref<4x8x128xf32, #tpu.memory_space<vmem>>, vector<1x8x128xf32>
    %15 = vector.shape_cast %14 : vector<1x8x128xf32> to vector<8x128xf32>
    %c0_10 = arith.constant 0 : index
    %c1_11 = arith.constant 1 : index
    %16 = memref.load %arg1[%c0_10, %c1_11] : memref<2x4xf32, #tpu.memory_space<smem>>
    %17 = vector.broadcast %16 : f32 to vector<8x128xf32>
    %18 = arith.mulf %17, %15 : vector<8x128xf32>
    %19 = arith.addf %9, %18 : vector<8x128xf32>
    %c1_12 = arith.constant 1 : index
    %c1_13 = arith.constant 1 : index
    %20 = memref.load %arg1[%c1_12, %c1_13] : memref<2x4xf32, #tpu.memory_space<smem>>
    %21 = vector.broadcast %20 : f32 to vector<8x128xf32>
    %22 = arith.mulf %21, %15 : vector<8x128xf32>
    %23 = arith.addf %13, %22 : vector<8x128xf32>
    %c2 = arith.constant 2 : index
    %c0_14 = arith.constant 0 : index
    %c0_15 = arith.constant 0 : index
    %24 = vector.load %arg3[%c2, %c0_14, %c0_15] : memref<4x8x128xf32, #tpu.memory_space<vmem>>, vector<1x8x128xf32>
    %25 = vector.shape_cast %24 : vector<1x8x128xf32> to vector<8x128xf32>
    %c0_16 = arith.constant 0 : index
    %c2_17 = arith.constant 2 : index
    %26 = memref.load %arg1[%c0_16, %c2_17] : memref<2x4xf32, #tpu.memory_space<smem>>
    %27 = vector.broadcast %26 : f32 to vector<8x128xf32>
    %28 = arith.mulf %27, %25 : vector<8x128xf32>
    %29 = arith.addf %19, %28 : vector<8x128xf32>
    %c1_18 = arith.constant 1 : index
    %c2_19 = arith.constant 2 : index
    %30 = memref.load %arg1[%c1_18, %c2_19] : memref<2x4xf32, #tpu.memory_space<smem>>
    %31 = vector.broadcast %30 : f32 to vector<8x128xf32>
    %32 = arith.mulf %31, %25 : vector<8x128xf32>
    %33 = arith.addf %23, %32 : vector<8x128xf32>
    %c3 = arith.constant 3 : index
    %c0_20 = arith.constant 0 : index
    %c0_21 = arith.constant 0 : index
    %34 = vector.load %arg3[%c3, %c0_20, %c0_21] : memref<4x8x128xf32, #tpu.memory_space<vmem>>, vector<1x8x128xf32>
    %35 = vector.shape_cast %34 : vector<1x8x128xf32> to vector<8x128xf32>
    %c0_22 = arith.constant 0 : index
    %c3_23 = arith.constant 3 : index
    %36 = memref.load %arg1[%c0_22, %c3_23] : memref<2x4xf32, #tpu.memory_space<smem>>
    %37 = vector.broadcast %36 : f32 to vector<8x128xf32>
    %38 = arith.mulf %37, %35 : vector<8x128xf32>
    %39 = arith.addf %29, %38 : vector<8x128xf32>
    %c1_24 = arith.constant 1 : index
    %c3_25 = arith.constant 3 : index
    %40 = memref.load %arg1[%c1_24, %c3_25] : memref<2x4xf32, #tpu.memory_space<smem>>
    %41 = vector.broadcast %40 : f32 to vector<8x128xf32>
    %42 = arith.mulf %41, %35 : vector<8x128xf32>
    %43 = arith.addf %33, %42 : vector<8x128xf32>
    %cst = arith.constant 0.000000e+00 : f32
    %44 = vector.broadcast %cst : f32 to vector<8x128xf32>
    %45 = arith.maximumf %39, %44 : vector<8x128xf32>
    %cst_26 = arith.constant 0.000000e+00 : f32
    %46 = vector.broadcast %cst_26 : f32 to vector<8x128xf32>
    %47 = arith.maximumf %43, %46 : vector<8x128xf32>
    %48 = tpu.concatenate %45, %47 in 1 : vector<8x128xf32>, vector<8x128xf32> -> vector<8x256xf32>
    %c0_27 = arith.constant 0 : index
    %c0_28 = arith.constant 0 : index
    %49 = vector.load %arg4[%c0_27, %c0_28] : memref<256x128xf32, #tpu.memory_space<vmem>>, vector<256x128xf32>
    %cst_29 = arith.constant dense<0.000000e+00> : vector<8x128xf32>
    %50 = tpu.matmul %48, %49, %cst_29 {dimension_numbers = #tpu.dot_dimension_numbers<[1], [0], [0], [1], [0, 0, 1, 1], [], []>} : vector<8x256xf32>, vector<256x128xf32>, vector<8x128xf32> -> vector<8x128xf32>
    %c0_30 = arith.constant 0 : index
    %c0_31 = arith.constant 0 : index
    %51 = vector.load %arg5[%c0_30, %c0_31] : memref<1x128xf32, #tpu.memory_space<vmem>>, vector<1x128xf32>
    %52 = vector.broadcast %51 : vector<1x128xf32> to vector<8x128xf32>
    %53 = arith.addf %50, %52 : vector<8x128xf32>
    %c0_32 = arith.constant 0 : index
    %c0_33 = arith.constant 0 : index
    %54 = vector.load %arg6[%c0_32, %c0_33] : memref<8x128xf32, #tpu.memory_space<vmem>>, vector<8x128xf32>
    tpu.vector_store %arg6[%c0_32, %c0_33], %53 {strides = array<i32>} : memref<8x128xf32, #tpu.memory_space<vmem>>, vector<8x128xf32>,
    return
  }
  func.func @transform_0(%arg0: i32) -> (i32, i32) {
    %c0_i32 = arith.constant 0 : i32
    %c0_i32_0 = arith.constant 0 : i32
    %c0_i32_1 = arith.constant 0 : i32
    return %c0_i32, %c0_i32_0 : i32, i32
  }
  func.func @transform_1(%arg0: i32) -> i32 {
    %c0_i32 = arith.constant 0 : i32
    %c0_i32_0 = arith.constant 0 : i32
    return %c0_i32 : i32
  }
  func.func @transform_2(%arg0: i32) -> (i32, i32, i32) {
    %c0_i32 = arith.constant 0 : i32
    %c0_i32_0 = arith.constant 0 : i32
    %c0_i32_1 = arith.constant 0 : i32
    return %c0_i32, %arg0, %c0_i32_0 : i32, i32, i32
  }
  func.func @transform_3(%arg0: i32) -> (i32, i32) {
    %c0_i32 = arith.constant 0 : i32
    %c0_i32_0 = arith.constant 0 : i32
    %c0_i32_1 = arith.constant 0 : i32
    return %c0_i32, %c0_i32_0 : i32, i32
  }
  func.func @transform_4(%arg0: i32) -> (i32, i32) {
    %c0_i32 = arith.constant 0 : i32
    %c0_i32_0 = arith.constant 0 : i32
    %c0_i32_1 = arith.constant 0 : i32
    return %c0_i32, %c0_i32_0 : i32, i32
  }
  func.func @transform_5(%arg0: i32) -> (i32, i32) {
    %c0_i32 = arith.constant 0 : i32
    %c0_i32_0 = arith.constant 0 : i32
    return %arg0, %c0_i32 : i32, i32
  }
}

</mosaic_0001>

<llo_original>
// kernel: tpu_custom_call.1
$region0: #{tpu_custom_call.1}
  #allocation0 [shape = 'u32[]', space=smem, size = 0x4, offset = 0x4, fixed_abs, tag = 'smem constant byte address 0x4 - core index']
  #allocation1 [shape = 'u32[144,128]{1,0:T(1,128)}', space=vmem, size = 0x12000, scoped, tag = 'internal scratch']
  %s0 = inlined_call_operand.hbm [shape: f32[2,4], index: 0, kind: input, shape index: {}]
  %s1 = inlined_call_operand.vmem [shape: f32[2], index: 1, kind: input, shape index: {}]
  %s2 = inlined_call_operand.hbm [shape: f32[4,8,128], index: 2, kind: input, shape index: {}]
  %s3 = inlined_call_operand.hbm [shape: f32[256,128], index: 3, kind: input, shape index: {}]
  %s4 = inlined_call_operand.vmem [shape: f32[1,128], index: 4, kind: input, shape index: {}]
  %s5 = inlined_call_operand.hbm [shape: f32[8,128], index: 5, kind: output, shape index: {}]
  %s6 = sld [smem:[#allocation0]]
  $region46: #{tpu_custom_call.1} parent=0
    _
  %s8 = ssub.s32 1, %s6
  %s9 = scalar_select 0, %s8, %s6
  $region1: #{tpu_custom_call.1} parent=0
    #allocation2 [shape = 'u8[1024]{0}', space=smem, size = 0x400, scoped, tag = 'input window, operand 0, single buffered']
    #allocation3 [shape = 's32[1]{0}', space=sflag, size = 0x4, scoped, tag = 'scoped memory for tpu_custom_call.1']
    #allocation4 [shape = 's32[1]{0}', space=sflag, size = 0x4, scoped, tag = 'scoped memory for tpu_custom_call.1']
    #allocation5 [shape = 's32[1]{0}', space=sflag, size = 0x4, scoped, tag = 'scoped memory for tpu_custom_call.1']
    #allocation6 [shape = 's32[1]{0}', space=sflag, size = 0x4, scoped, tag = 'scoped memory for tpu_custom_call.1']
    #allocation7 [shape = 'u8[512]{0}', space=smem, size = 0x200, scoped, tag = 'input window, operand 1, single buffered']
    #allocation8 [shape = 'u8[16384]{0}', space=vmem, size = 0x4000, scoped, tag = 'input window, operand 2, single buffered']
    #allocation9 [shape = 'u8[131072]{0}', space=vmem, size = 0x20000, scoped, tag = 'input window, operand 3, single buffered']
    #allocation10 [shape = 's32[1]{0}', space=sflag, size = 0x4, scoped, tag = 'scoped memory for tpu_custom_call.1']
    #allocation11 [shape = 'u8[4096]{0}', space=vmem, size = 0x1000, scoped, tag = 'output window, operand 0, single buffered']
    %10 = vsyncpa [#allocation5], 0
    %11 = vsyncpa [#allocation6], 0
    %12 = vsyncpa [#allocation3], 0
    %13 = vsyncpa [#allocation10], 0
    %14 = vsyncpa [#allocation4], 0
    // Predicated region
    $region2: #{tpu_custom_call.1} parent=1 // pred_check
      _
    $region3: #{tpu_custom_call.1} parent=1 // pred_check_branch
      %16 = sbr.rel (0) target = $region5
    $region4: #{tpu_custom_call.1} parent=1 // pred_region
      %s18 = ssub.s32 32, 32
      %19 = vsyncadd [#allocation5], %s18
      %22 = dma.hbm_to_smem %s0, 32, [#allocation2], [#allocation5]
    $region5: #{tpu_custom_call.1} parent=1 // pred_fallthru
      _
    // Predicated region
    $region6: #{tpu_custom_call.1} parent=1 // pred_check
      _
    $region7: #{tpu_custom_call.1} parent=1 // pred_check_branch
      %24 = sbr.rel (0) target = $region9
    $region8: #{tpu_custom_call.1} parent=1 // pred_region
      %s26 = ssub.s32 16, 16
      %27 = vsyncadd [#allocation6], %s26
      %s29 = sshll.u32 %s1, 4
      %s30 = int_to_ptr.vmem [resolvable:$true] %s29
      %32 = dma.vmem_to_smem %s30, 16, [#allocation7], [#allocation6]
    $region9: #{tpu_custom_call.1} parent=1 // pred_fallthru
      _
    // Predicated region
    $region10: #{tpu_custom_call.1} parent=1 // pred_check
      _
    $region11: #{tpu_custom_call.1} parent=1 // pred_check_branch
      %34 = sbr.rel (0) target = $region13
    $region12: #{tpu_custom_call.1} parent=1 // pred_region
      %s36 = ssub.s32 512, 512
      %37 = vsyncadd [#allocation3], %s36
      %s38 = sshll.u32 [#allocation8], 4
      %s39 = int_to_ptr.vmem [resolvable:$true] %s38
      %44 = dma.hbm_to_vmem [thread:$0]  %s2, 512, %s39, [#allocation3], 128, 128, 8
    $region13: #{tpu_custom_call.1} parent=1 // pred_fallthru
      _
    // Predicated region
    $region14: #{tpu_custom_call.1} parent=1 // pred_check
      _
    $region15: #{tpu_custom_call.1} parent=1 // pred_check_branch
      %46 = sbr.rel (0) target = $region17
    $region16: #{tpu_custom_call.1} parent=1 // pred_region
      %s48 = ssub.s32 4096, 4096
      %49 = vsyncadd [#allocation10], %s48
      %s50 = sshll.u32 [#allocation9], 4
      %s51 = int_to_ptr.vmem [resolvable:$true] %s50
      %56 = dma.hbm_to_vmem [thread:$0]  %s3, 4096, %s51, [#allocation10], 128, 128, 8
    $region17: #{tpu_custom_call.1} parent=1 // pred_fallthru
      _
    // Predicated region
    $region18: #{tpu_custom_call.1} parent=1 // pred_check
      _
    $region19: #{tpu_custom_call.1} parent=1 // pred_check_branch
      %58 = sbr.rel (0) target = $region21
    $region20: #{tpu_custom_call.1} parent=1 // pred_region
      _
    $region21: #{tpu_custom_call.1} parent=1 // pred_fallthru
      _
    // Predicated region
    $region22: #{tpu_custom_call.1} parent=1 // pred_check
      _
    $region23: #{tpu_custom_call.1} parent=1 // pred_check_branch
      %60 = sbr.rel (0) target = $region25
    $region24: #{tpu_custom_call.1} parent=1 // pred_region
      %61 = dma.done [#allocation5], 32
    $region25: #{tpu_custom_call.1} parent=1 // pred_fallthru
      _
    // Predicated region
    $region26: #{tpu_custom_call.1} parent=1 // pred_check
      _
    $region27: #{tpu_custom_call.1} parent=1 // pred_check_branch
      %63 = sbr.rel (0) target = $region29
    $region28: #{tpu_custom_call.1} parent=1 // pred_region
      %64 = dma.done [#allocation6], 16
    $region29: #{tpu_custom_call.1} parent=1 // pred_fallthru
      _
    // Predicated region
    $region30: #{tpu_custom_call.1} parent=1 // pred_check
      _
    $region31: #{tpu_custom_call.1} parent=1 // pred_check_branch
      %66 = sbr.rel (0) target = $region33
    $region32: #{tpu_custom_call.1} parent=1 // pred_region
      %67 = dma.done [#allocation3], 512
    $region33: #{tpu_custom_call.1} parent=1 // pred_fallthru
      _
    // Predicated region
    $region34: #{tpu_custom_call.1} parent=1 // pred_check
      _
    $region35: #{tpu_custom_call.1} parent=1 // pred_check_branch
      %69 = sbr.rel (0) target = $region37
    $region36: #{tpu_custom_call.1} parent=1 // pred_region
      %70 = dma.done [#allocation10], 4096
    $region37: #{tpu_custom_call.1} parent=1 // pred_fallthru
      _
    %71 = sfence
    %s72 = sld [smem:[#allocation7]]
    %v73 = vstv %s72
    %s74 = sld [smem:[#allocation7 + $0x1]]
    %v75 = vstv %s74
    %v76 = vld [vmem:[#allocation8] sm:$0xff]
    %s77 = sld [smem:[#allocation2]]
    %v78 = vstv %s77
    %v79 = vmul.f32 %v78, %v76
    %v80 = vadd.f32 %v73, %v79
    %s81 = sld [smem:[#allocation2 + $0x80]]
    %v82 = vstv %s81
    %v83 = vmul.f32 %v82, %v76
    %v84 = vadd.f32 %v75, %v83
    %s85 = scalar_lea.vmem [#allocation8], 8
    %v86 = vld [vmem:[%s85] sm:$0xff]
    %s87 = sld [smem:[#allocation2 + $0x1]]
    %v88 = vstv %s87
    %v89 = vmul.f32 %v88, %v86
    %v90 = vadd.f32 %v80, %v89
    %s91 = sld [smem:[#allocation2 + $0x81]]
    %v92 = vstv %s91
    %v93 = vmul.f32 %v92, %v86
    %v94 = vadd.f32 %v84, %v93
    %s95 = scalar_lea.vmem [#allocation8], 16
    %v96 = vld [vmem:[%s95] sm:$0xff]
    %s97 = sld [smem:[#allocation2 + $0x2]]
    %v98 = vstv %s97
    %v99 = vmul.f32 %v98, %v96
    %v100 = vadd.f32 %v90, %v99
    %s101 = sld [smem:[#allocation2 + $0x82]]
    %v102 = vstv %s101
    %v103 = vmul.f32 %v102, %v96
    %v104 = vadd.f32 %v94, %v103
    %s105 = scalar_lea.vmem [#allocation8], 24
    %v106 = vld [vmem:[%s105] sm:$0xff]
    %s107 = sld [smem:[#allocation2 + $0x3]]
    %v108 = vstv %s107
    %v109 = vmul.f32 %v108, %v106
    %v110 = vadd.f32 %v100, %v109
    %s111 = sld [smem:[#allocation2 + $0x83]]
    %v112 = vstv %s111
    %v113 = vmul.f32 %v112, %v106
    %v114 = vadd.f32 %v104, %v113
    %v115 = vmax.f32 %v110, 0.0
    %v116 = vmax.f32 %v114, 0.0
    %v117 = vld [vmem:[#allocation9] sm:$0xff]
    %v118 = vld [vmem:[#allocation9 + $0x8] sm:$0xff]
    %v119 = vld [vmem:[#allocation9 + $0x10] sm:$0xff]
    %v120 = vld [vmem:[#allocation9 + $0x18] sm:$0xff]
    %v121 = vld [vmem:[#allocation9 + $0x20] sm:$0xff]
    %v122 = vld [vmem:[#allocation9 + $0x28] sm:$0xff]
    %v123 = vld [vmem:[#allocation9 + $0x30] sm:$0xff]
    %v124 = vld [vmem:[#allocation9 + $0x38] sm:$0xff]
    %v125 = vld [vmem:[#allocation9 + $0x40] sm:$0xff]
    %v126 = vld [vmem:[#allocation9 + $0x48] sm:$0xff]
    %v127 = vld [vmem:[#allocation9 + $0x50] sm:$0xff]
    %v128 = vld [vmem:[#allocation9 + $0x58] sm:$0xff]
    %v129 = vld [vmem:[#allocation9 + $0x60] sm:$0xff]
    %v130 = vld [vmem:[#allocation9 + $0x68] sm:$0xff]
    %v131 = vld [vmem:[#allocation9 + $0x70] sm:$0xff]
    %v132 = vld [vmem:[#allocation9 + $0x78] sm:$0xff]
    %v133 = vld [vmem:[#allocation9 + $0x80] sm:$0xff]
    %v134 = vld [vmem:[#allocation9 + $0x88] sm:$0xff]
    %v135 = vld [vmem:[#allocation9 + $0x90] sm:$0xff]
    %v136 = vld [vmem:[#allocation9 + $0x98] sm:$0xff]
    %v137 = vld [vmem:[#allocation9 + $0xa0] sm:$0xff]
    %v138 = vld [vmem:[#allocation9 + $0xa8] sm:$0xff]
    %v139 = vld [vmem:[#allocation9 + $0xb0] sm:$0xff]
    %v140 = vld [vmem:[#allocation9 + $0xb8] sm:$0xff]
    %v141 = vld [vmem:[#allocation9 + $0xc0] sm:$0xff]
    %v142 = vld [vmem:[#allocation9 + $0xc8] sm:$0xff]
    %v143 = vld [vmem:[#allocation9 + $0xd0] sm:$0xff]
    %v144 = vld [vmem:[#allocation9 + $0xd8] sm:$0xff]
    %v145 = vld [vmem:[#allocation9 + $0xe0] sm:$0xff]
    %v146 = vld [vmem:[#allocation9 + $0xe8] sm:$0xff]
    %v147 = vld [vmem:[#allocation9 + $0xf0] sm:$0xff]
    %v148 = vld [vmem:[#allocation9 + $0xf8] sm:$0xff]
    %v149 = vld [vmem:[%s4] sm:$0x1]
    %v151 = vlaneseq
    %v152 = vshrl.u32 %v151, 7
    %v153 = vsub.s32 0, %v152
    %v154 = vrot.slane %v149, %v153
    %156 = vmatprep.subr.mxu0 0.0
    %157 = vmatpush1.msra.mxu0 %v117
    %158 = vmatprep.subr.mxu0 0.0
    %159 = vmatpush1.msra.mxu0 %v118
    %160 = vmatprep.subr.mxu0 0.0
    %161 = vmatpush1.msra.mxu0 %v119
    %162 = vmatprep.subr.mxu0 0.0
    %163 = vmatpush1.msra.mxu0 %v120
    %164 = vmatprep.subr.mxu0 0.0
    %165 = vmatpush1.msra.mxu0 %v121
    %166 = vmatprep.subr.mxu0 0.0
    %167 = vmatpush1.msra.mxu0 %v122
    %168 = vmatprep.subr.mxu0 0.0
    %169 = vmatpush1.msra.mxu0 %v123
    %170 = vmatprep.subr.mxu0 0.0
    %171 = vmatpush1.msra.mxu0 %v124
    %172 = vmatprep.subr.mxu0 0.0
    %173 = vmatpush1.msra.mxu0 %v125
    %174 = vmatprep.subr.mxu0 0.0
    %175 = vmatpush1.msra.mxu0 %v126
    %176 = vmatprep.subr.mxu0 0.0
    %177 = vmatpush1.msra.mxu0 %v127
    %178 = vmatprep.subr.mxu0 0.0
    %179 = vmatpush1.msra.mxu0 %v128
    %180 = vmatprep.subr.mxu0 0.0
    %181 = vmatpush1.msra.mxu0 %v129
    %182 = vmatprep.subr.mxu0 0.0
    %183 = vmatpush1.msra.mxu0 %v130
    %184 = vmatprep.subr.mxu0 0.0
    %185 = vmatpush1.msra.mxu0 %v131
    %186 = vmatprep.subr.mxu0 0.0
    %187 = vmatpush1.msra.mxu0 %v132
    %188 = vmatprep.subr.mxu0 0.0
    %189 = vmatpush1.msra.mxu0 %v133
    %190 = vmatprep.subr.mxu0 0.0
    %191 = vmatpush1.msra.mxu0 %v134
    %192 = vmatprep.subr.mxu0 0.0
    %193 = vmatpush1.msra.mxu0 %v135
    %194 = vmatprep.subr.mxu0 0.0
    %195 = vmatpush1.msra.mxu0 %v136
    %196 = vmatprep.subr.mxu0 0.0
    %197 = vmatpush1.msra.mxu0 %v137
    %198 = vmatprep.subr.mxu0 0.0
    %199 = vmatpush1.msra.mxu0 %v138
    %200 = vmatprep.subr.mxu0 0.0
    %201 = vmatpush1.msra.mxu0 %v139
    %202 = vmatprep.subr.mxu0 0.0
    %203 = vmatpush1.msra.mxu0 %v140
    %204 = vmatprep.subr.mxu0 0.0
    %205 = vmatpush1.msra.mxu0 %v141
    %206 = vmatprep.subr.mxu0 0.0
    %207 = vmatpush1.msra.mxu0 %v142
    %208 = vmatprep.subr.mxu0 0.0
    %209 = vmatpush1.msra.mxu0 %v143
    %210 = vmatprep.subr.mxu0 0.0
    %211 = vmatpush1.msra.mxu0 %v144
    %212 = vmatprep.subr.mxu0 0.0
    %213 = vmatpush1.msra.mxu0 %v145
    %214 = vmatprep.subr.mxu0 0.0
    %215 = vmatpush1.msra.mxu0 %v146
    %216 = vmatprep.subr.mxu0 0.0
    %217 = vmatpush1.msra.mxu0 %v147
    %218 = vmatprep.subr.mxu0 0.0
    %219 = vmatpush1.msra.mxu0 %v148
    %220 = vmatprep.mubr.f32.mxu0 %v116
    %221 = vmatmul.mubr.f32.gmra.mrb[0].mxu0 %v115
    %v222 = vpop.f32.mrb[0].mxu0
    %v223 = vadd.f32 %v154, %v222
    %v224 = vpop.f32.mrb[0].mxu0
    %225 = vdwg.mxu0
    %226 = vst [vmem:[#allocation11] sm:$0xff] %v223
    // Predicated region
    $region38: #{tpu_custom_call.1} parent=1 // pred_check
      _
    $region39: #{tpu_custom_call.1} parent=1 // pred_check_branch
      %228 = sbr.rel (0) target = $region41
    $region40: #{tpu_custom_call.1} parent=1 // pred_region
      %s230 = ssub.s32 128, 128
      %231 = vsyncadd [#allocation4], %s230
      %s233 = sshll.u32 [#allocation11], 4
      %s234 = int_to_ptr.vmem [resolvable:$true] %s233
      %236 = dma.vmem_to_hbm [thread:$0]  %s234, 128, %s5, [#allocation4]
    $region41: #{tpu_custom_call.1} parent=1 // pred_fallthru
      _
    // Predicated region
    $region42: #{tpu_custom_call.1} parent=1 // pred_check
      _
    $region43: #{tpu_custom_call.1} parent=1 // pred_check_branch
      %238 = sbr.rel (0) target = $region45
    $region44: #{tpu_custom_call.1} parent=1 // pred_region
      %239 = dma.done [#allocation4], 128
    $region45: #{tpu_custom_call.1} parent=1 // pred_fallthru
      _
    %240 = vsyncpa [#allocation3], 1
    %241 = vsyncpa [#allocation10], 1
    %242 = vsyncpa [#allocation4], 1
    %243 = vsyncpa [#allocation5], 1
    %244 = vsyncpa [#allocation6], 1

</llo_original>
